<compile_context>
chip_gen: v5e
topology: v5e:2x2
jax: 0.10.0
libtpu: 0.0.40
codegen_flags: <defaults>
</compile_context>

<pallas_src>
import jax
import jax.numpy as jnp
import numpy as np
from jax import lax
from jax.experimental import pallas as pl
from jax.experimental.pallas import tpu as pltpu


def _round_up(x: int, m: int) -> int:
    return ((x + m - 1) // m) * m


def _make_triplet_loss_kernel(margin: float, eps: float, num_triplets: int, tile_t: int):
    margin = float(margin)
    eps = float(eps)

    def kernel(g_ref, out_ref, acc_ref):
        b = pl.program_id(0)

        @pl.when(b == 0)
        def _init():
            acc_ref[...] = jnp.zeros_like(acc_ref)

        # g_ref block is (3, tile_t, D): anchor / positive / negative planes.
        # Upcast bf16 -> f32 in VMEM.
        a = g_ref[0].astype(jnp.float32)  # [tile_t, D]
        p = g_ref[1].astype(jnp.float32)  # [tile_t, D]
        n = g_ref[2].astype(jnp.float32)  # [tile_t, D]

        # F.pairwise_distance(x1, x2, p=2, eps=1e-6) == ||x1 - x2 + eps||_2
        d_ap = jnp.sqrt(jnp.sum((a - p + eps) ** 2, axis=-1, keepdims=True))  # [tile_t,1]
        d_an = jnp.sqrt(jnp.sum((a - n + eps) ** 2, axis=-1, keepdims=True))  # [tile_t,1]

        losses = jnp.maximum(d_ap - d_an + margin, 0.0)  # [tile_t, 1]

        # Zero out the padded (dummy) triplets of the last block.
        row = b * tile_t + lax.broadcasted_iota(jnp.int32, (tile_t, 1), 0)
        losses = jnp.where(row < num_triplets, losses, 0.0)

        # One scalar per step into the resident f32 scratch accumulator.
        acc_ref[...] += jnp.sum(losses, keepdims=True)  # (1, 1)

        @pl.when(b == pl.num_programs(0) - 1)
        def _finalize():
            out_ref[...] = acc_ref[...]

    return kernel


def triplet_loss(embeddings, triplets, margin, eps: float = 1e-6, tile_t: int = 128):
    """JAX/Pallas equivalent of TripletLoss.forward.

    embeddings: [B, D] float array (bf16 or f32; kept in native dtype in HBM).
    triplets:   [T, 3] int32 (anchor, positive, negative) row indices, produced
                by the triplet selector outside the kernel.
    margin:     static Python float (module hyperparameter).
    Returns (losses.sum() as f32 scalar, number of triplets as Python int).
    """
    B, D = embeddings.shape
    triplets = jnp.asarray(triplets, dtype=jnp.int32)
    T = int(triplets.shape[0])
    if T == 0:
        return jnp.float32(0.0), 0

    # Triplet block size: multiple of 8 (sublane-dense), capped so tiny T is not
    # over-padded; sweepable (128-512) for large T.
    tile_t = int(min(tile_t, _round_up(T, 8)))
    t_pad = _round_up(T, tile_t)
    num_blocks = t_pad // tile_t

    # Single XLA gather -> one contiguous [3, T, D] stream (anchor/positive/negative
    # planes), zero-padded along the triplet axis (padded rows are masked in-kernel).
    gathered = jnp.take(embeddings, triplets.T, axis=0)  # [3, T, D], native dtype
    if t_pad != T:
        gathered = jnp.pad(gathered, ((0, 0), (0, t_pad - T), (0, 0)))

    kernel = _make_triplet_loss_kernel(margin, eps, T, tile_t)

    itemsize = embeddings.dtype.itemsize
    cost = pl.CostEstimate(
        flops=T * (8 * D + 8),          # diffs/squares/sums + loss combine
        transcendentals=2 * T,          # two sqrt per triplet
        bytes_accessed=3 * t_pad * D * itemsize + 4,
    )

    grid_spec = pltpu.PrefetchScalarGridSpec(
        num_scalar_prefetch=0,
        grid=(num_blocks,),
        in_specs=[
            # One stream: (3, tile_t, D) blocks, last two dims sublane/lane-dense.
            pl.BlockSpec((3, tile_t, D), lambda b: (0, b, 0)),
        ],
        out_specs=pl.BlockSpec((1, 1), lambda b: (0, 0)),   # written once at last step
        scratch_shapes=[pltpu.VMEM((1, 1), jnp.float32)],    # resident accumulator
    )

    out = pl.pallas_call(
        kernel,
        out_shape=jax.ShapeDtypeStruct((1, 1), jnp.float32),
        grid_spec=grid_spec,
        compiler_params=pltpu.CompilerParams(
            dimension_semantics=("arbitrary",),   # triplet-block axis is a reduction
        ),
        cost_estimate=cost,
    )(gathered)

    return out[0, 0], T


def _simple_triplet_selector(labels):
    """Deterministic stand-in for triplet_selector.get_triplets (host-side)."""
    labels = np.asarray(labels)
    trips = []
    for i in range(labels.shape[0]):
        same = np.flatnonzero(labels == labels[i])
        diff = np.flatnonzero(labels != labels[i])
        pos = same[same != i]
        if pos.size == 0 or diff.size == 0:
            continue
        trips.append((i, int(pos[0]), int(diff[0])))
    return np.asarray(trips, dtype=np.int32)


def _reference_triplet_loss(embeddings, triplets, margin, eps: float = 1e-6):
    e = embeddings.astype(jnp.float32)
    a = e[triplets[:, 0]]
    p = e[triplets[:, 1]]
    n = e[triplets[:, 2]]
    d_ap = jnp.sqrt(jnp.sum((a - p + eps) ** 2, axis=-1))
    d_an = jnp.sqrt(jnp.sum((a - n + eps) ** 2, axis=-1))
    losses = jnp.maximum(d_ap - d_an + margin, 0.0)
    return jnp.sum(losses), int(triplets.shape[0])


if __name__ == "__main__":
    key = jax.random.PRNGKey(0)

    B = 16            # batch (embeddings rows)
    D = 128           # embedding dim (lane-dense)
    NUM_CLASSES = 4
    MARGIN = 1.0

    # Deterministic labels: 4 classes x 4 samples.
    labels = np.repeat(np.arange(NUM_CLASSES, dtype=np.int32), B // NUM_CLASSES)

    # bf16 embeddings in HBM; the kernel upcasts to f32 in VMEM.
    embeddings = jax.random.normal(key, (B, D), dtype=jnp.float32).astype(jnp.bfloat16)

    triplets = _simple_triplet_selector(labels)          # [T, 3] int32, T == 16

    loss, n_triplets = triplet_loss(embeddings, triplets, margin=MARGIN)
    loss = jax.block_until_ready(loss)

    ref_loss, ref_n = _reference_triplet_loss(embeddings, jnp.asarray(triplets), MARGIN)
    np.testing.assert_allclose(np.asarray(loss), np.asarray(ref_loss),
                               rtol=1e-4, atol=1e-4)
    assert n_triplets == ref_n

    print("KERNEL_OK")
</pallas_src>

<mosaic_0001>
module attributes {stable_mosaic.version = 11 : i64} {
  func.func @kernel(%arg0: i32, %arg1: memref<3x16x128xbf16, #tpu.memory_space<vmem>>, %arg2: memref<1x1xf32, #tpu.memory_space<vmem>>, %arg3: memref<1x1xf32, #tpu.memory_space<vmem>>) attributes {dimension_semantics = [#tpu.dimension_semantics<arbitrary>], iteration_bounds = array<i64: 1>, scalar_prefetch = 0 : i64, scratch_operands = 1 : i64, tpu.core_type = #tpu.core_type<tc>, window_params = [{transform_indices = @transform_0, window_bounds = array<i64: 3, 16, 128>}, {pipeline_mode = #tpu.pipeline_mode<synchronous>, transform_indices = @transform_1, window_bounds = array<i64: 1, 1>}]} {
    %c0_i32 = arith.constant 0 : i32
    %0 = arith.cmpi eq, %arg0, %c0_i32 : i32
    %1 = arith.extui %0 : i1 to i32
    %c0_i32_0 = arith.constant 0 : i32
    %2 = arith.cmpi ne, %1, %c0_i32_0 : i32
    scf.if %2 {
      %cst_21 = arith.constant 0.000000e+00 : f32
      %50 = vector.broadcast %cst_21 : f32 to vector<1x1xf32>
      %c0_22 = arith.constant 0 : index
      %c0_23 = arith.constant 0 : index
      %51 = vector.load %arg3[%c0_22, %c0_23] : memref<1x1xf32, #tpu.memory_space<vmem>>, vector<1x1xf32>
      tpu.vector_store %arg3[%c0_22, %c0_23], %50 {strides = array<i32>} : memref<1x1xf32, #tpu.memory_space<vmem>>, vector<1x1xf32>,
    } else {
    }
    %c0 = arith.constant 0 : index
    %c0_1 = arith.constant 0 : index
    %c0_2 = arith.constant 0 : index
    %3 = vector.load %arg1[%c0, %c0_1, %c0_2] : memref<3x16x128xbf16, #tpu.memory_space<vmem>>, vector<1x16x128xbf16>
    %4 = vector.shape_cast %3 : vector<1x16x128xbf16> to vector<16x128xbf16>
    %5 = arith.extf %4 : vector<16x128xbf16> to vector<16x128xf32>
    %c1 = arith.constant 1 : index
    %c0_3 = arith.constant 0 : index
    %c0_4 = arith.constant 0 : index
    %6 = vector.load %arg1[%c1, %c0_3, %c0_4] : memref<3x16x128xbf16, #tpu.memory_space<vmem>>, vector<1x16x128xbf16>
    %7 = vector.shape_cast %6 : vector<1x16x128xbf16> to vector<16x128xbf16>
    %8 = arith.extf %7 : vector<16x128xbf16> to vector<16x128xf32>
    %c2 = arith.constant 2 : index
    %c0_5 = arith.constant 0 : index
    %c0_6 = arith.constant 0 : index
    %9 = vector.load %arg1[%c2, %c0_5, %c0_6] : memref<3x16x128xbf16, #tpu.memory_space<vmem>>, vector<1x16x128xbf16>
    %10 = vector.shape_cast %9 : vector<1x16x128xbf16> to vector<16x128xbf16>
    %11 = arith.extf %10 : vector<16x128xbf16> to vector<16x128xf32>
    %12 = arith.subf %5, %8 : vector<16x128xf32>
    %cst = arith.constant 9.99999997E-7 : f32
    %13 = vector.broadcast %cst : f32 to vector<16x128xf32>
    %14 = arith.addf %12, %13 : vector<16x128xf32>
    %15 = arith.mulf %14, %14 : vector<16x128xf32>
    %cst_7 = arith.constant dense<0.000000e+00> : vector<16xf32>
    %16 = vector.multi_reduction <add>, %15, %cst_7 [1] : vector<16x128xf32> to vector<16xf32>
    %17 = vector.shape_cast %16 : vector<16xf32> to vector<16x1xf32>
    %18 = math.sqrt %17 : vector<16x1xf32>
    %19 = arith.subf %5, %11 : vector<16x128xf32>
    %cst_8 = arith.constant 9.99999997E-7 : f32
    %20 = vector.broadcast %cst_8 : f32 to vector<16x128xf32>
    %21 = arith.addf %19, %20 : vector<16x128xf32>
    %22 = arith.mulf %21, %21 : vector<16x128xf32>
    %cst_9 = arith.constant dense<0.000000e+00> : vector<16xf32>
    %23 = vector.multi_reduction <add>, %22, %cst_9 [1] : vector<16x128xf32> to vector<16xf32>
    %24 = vector.shape_cast %23 : vector<16xf32> to vector<16x1xf32>
    %25 = math.sqrt %24 : vector<16x1xf32>
    %26 = arith.subf %18, %25 : vector<16x1xf32>
    %cst_10 = arith.constant 1.000000e+00 : f32
    %27 = vector.broadcast %cst_10 : f32 to vector<16x1xf32>
    %28 = arith.addf %26, %27 : vector<16x1xf32>
    %cst_11 = arith.constant 0.000000e+00 : f32
    %29 = vector.broadcast %cst_11 : f32 to vector<16x1xf32>
    %30 = arith.maximumf %28, %29 : vector<16x1xf32>
    %c16_i32 = arith.constant 16 : i32
    %31 = arith.muli %arg0, %c16_i32 : i32
    %32 = tpu.iota {dimensions = array<i32: 0>} : vector<16x1xi32>
    %33 = vector.broadcast %31 : i32 to vector<16x1xi32>
    %34 = arith.addi %33, %32 : vector<16x1xi32>
    %c16_i32_12 = arith.constant 16 : i32
    %35 = vector.broadcast %c16_i32_12 : i32 to vector<16x1xi32>
    %36 = arith.cmpi slt, %34, %35 : vector<16x1xi32>
    %cst_13 = arith.constant 0.000000e+00 : f32
    %37 = vector.broadcast %cst_13 : f32 to vector<16x1xf32>
    %38 = arith.select %36, %30, %37 : vector<16x1xi1>, vector<16x1xf32>
    %c0_14 = arith.constant 0 : index
    %c0_15 = arith.constant 0 : index
    %39 = vector.load %arg3[%c0_14, %c0_15] : memref<1x1xf32, #tpu.memory_space<vmem>>, vector<1x1xf32>
    %40 = vector.shape_cast %38 : vector<16x1xf32> to vector<1x16x1xf32>
    %cst_16 = arith.constant dense<0.000000e+00> : vector<1xf32>
    %41 = vector.multi_reduction <add>, %40, %cst_16 [1, 2] : vector<1x16x1xf32> to vector<1xf32>
    %42 = vector.shape_cast %41 : vector<1xf32> to vector<1x1x1xf32>
    %43 = vector.extract %42[0, 0, 0] : f32 from vector<1x1x1xf32>
    %44 = vector.broadcast %43 : f32 to vector<1x1xf32>
    %45 = arith.addf %39, %44 : vector<1x1xf32>
    %c0_17 = arith.constant 0 : index
    %c0_18 = arith.constant 0 : index
    %46 = vector.load %arg3[%c0_17, %c0_18] : memref<1x1xf32, #tpu.memory_space<vmem>>, vector<1x1xf32>
    tpu.vector_store %arg3[%c0_17, %c0_18], %45 {strides = array<i32>} : memref<1x1xf32, #tpu.memory_space<vmem>>, vector<1x1xf32>,
    %c0_i32_19 = arith.constant 0 : i32
    %47 = arith.cmpi eq, %arg0, %c0_i32_19 : i32
    %48 = arith.extui %47 : i1 to i32
    %c0_i32_20 = arith.constant 0 : i32
    %49 = arith.cmpi ne, %48, %c0_i32_20 : i32
    scf.if %49 {
      %c0_21 = arith.constant 0 : index
      %c0_22 = arith.constant 0 : index
      %50 = vector.load %arg3[%c0_21, %c0_22] : memref<1x1xf32, #tpu.memory_space<vmem>>, vector<1x1xf32>
      %c0_23 = arith.constant 0 : index
      %c0_24 = arith.constant 0 : index
      %51 = vector.load %arg2[%c0_23, %c0_24] : memref<1x1xf32, #tpu.memory_space<vmem>>, vector<1x1xf32>
      tpu.vector_store %arg2[%c0_23, %c0_24], %50 {strides = array<i32>} : memref<1x1xf32, #tpu.memory_space<vmem>>, vector<1x1xf32>,
    } else {
    }
    return
  }
  func.func @transform_0(%arg0: i32) -> (i32, i32, i32) {
    %c0_i32 = arith.constant 0 : i32
    %c0_i32_0 = arith.constant 0 : i32
    %c0_i32_1 = arith.constant 0 : i32
    return %c0_i32, %arg0, %c0_i32_0 : i32, i32, i32
  }
  func.func @transform_1(%arg0: i32) -> (i32, i32) {
    %c0_i32 = arith.constant 0 : i32
    %c0_i32_0 = arith.constant 0 : i32
    %c0_i32_1 = arith.constant 0 : i32
    return %c0_i32, %c0_i32_0 : i32, i32
  }
}

</mosaic_0001>

<llo_original>
// kernel: tpu_custom_call.1
$region0: #{tpu_custom_call.1}
  #allocation0 [shape = 'u32[]', space=smem, size = 0x4, offset = 0x4, fixed_abs, tag = 'smem constant byte address 0x4 - core index']
  #allocation1 [shape = 'u32[72,128]{1,0:T(1,128)}', space=vmem, size = 0x9000, scoped, tag = 'internal scratch']
  #allocation2 [shape = 'f32[1,1]{1,0:T(1,128)}', space=vmem, size = 0x200, scoped, tag = 'scratch operand']
  %s0 = inlined_call_operand.hbm [shape: bf16[3,16,128], index: 0, kind: input, shape index: {}]
  %s1 = inlined_call_operand.hbm [shape: f32[1,1], index: 1, kind: output, shape index: {}]
  %s2 = sld [smem:[#allocation0]]
  $region26: #{tpu_custom_call.1} parent=0
    _
  %s4 = ssub.s32 1, %s2
  %s5 = scalar_select 0, %s4, %s2
  $region1: #{tpu_custom_call.1} parent=0
    #allocation3 [shape = 'u8[12288]{0}', space=vmem, size = 0x3000, scoped, tag = 'input window, operand 0, single buffered']
    #allocation4 [shape = 's32[1]{0}', space=sflag, size = 0x4, scoped, tag = 'scoped memory for tpu_custom_call.1']
    #allocation5 [shape = 's32[1]{0}', space=sflag, size = 0x4, scoped, tag = 'scoped memory for tpu_custom_call.1']
    #allocation6 [shape = 'u8[512]{0}', space=vmem, size = 0x400, scoped, tag = 'output window, operand 0, single buffered']
    %6 = vsyncpa [#allocation4], 0
    %7 = vsyncpa [#allocation5], 0
    // Predicated region
    $region2: #{tpu_custom_call.1} parent=1 // pred_check
      _
    $region3: #{tpu_custom_call.1} parent=1 // pred_check_branch
      %9 = sbr.rel (0) target = $region5
    $region4: #{tpu_custom_call.1} parent=1 // pred_region
      %11 = vsyncadd [#allocation4], 0
      %s12 = sshll.u32 %s0, 4
      %s13 = int_to_ptr.hbm [resolvable:$true] %s12
      %s14 = sshll.u32 [#allocation3], 4
      %s15 = int_to_ptr.vmem [resolvable:$true] %s14
      %20 = dma.hbm_to_vmem [thread:$0]  %s13, 384, %s15, [#allocation4], 64, 64, 4
    $region5: #{tpu_custom_call.1} parent=1 // pred_fallthru
      _
    // Predicated region
    $region6: #{tpu_custom_call.1} parent=1 // pred_check
      _
    $region7: #{tpu_custom_call.1} parent=1 // pred_check_branch
      %22 = sbr.rel (0) target = $region9
    $region8: #{tpu_custom_call.1} parent=1 // pred_region
      %24 = dma.done [#allocation4], 384
    $region9: #{tpu_custom_call.1} parent=1 // pred_fallthru
      _
    %p25 = scmp.eq.s32.totalorder 0, 0
    // Predicated region
    $region10: #{tpu_custom_call.1} parent=1 // pred_check
      %p26 = pneg %p25
    $region11: #{tpu_custom_call.1} parent=1 // pred_check_branch
      %28 = sbr.rel (%p26) target = $region13
    $region12: #{tpu_custom_call.1} parent=1 // pred_region
      %vm29 = vcmask 0
      %30 = vst.msk [vmem:[#allocation2] sm:$0x1] %vm29, 0.0
    $region13: #{tpu_custom_call.1} parent=1 // pred_fallthru
      _
    %v31 = vld [vmem:[#allocation3] sm:$0xf]
    %v32 = vld [vmem:[#allocation3 + $0x4] sm:$0xf]
    %v33 = vunpack.c.l.bf16 %v31
    %v34 = vunpack.c.l.bf16 %v32
    %s35 = scalar_lea.vmem [#allocation3], 8
    %v36 = vld [vmem:[%s35] sm:$0xf]
    %v37 = vld [vmem:[%s35 + $0x4] sm:$0xf]
    %v38 = vunpack.c.l.bf16 %v36
    %v39 = vunpack.c.l.bf16 %v37
    %s40 = scalar_lea.vmem [#allocation3], 16
    %v41 = vld [vmem:[%s40] sm:$0xf]
    %v42 = vld [vmem:[%s40 + $0x4] sm:$0xf]
    %v43 = vunpack.c.l.bf16 %v41
    %v44 = vunpack.c.l.bf16 %v42
    %v45 = vsub.f32 %v33, %v38
    %v46 = vsub.f32 %v34, %v39
    %v47 = vadd.f32 %v45, 1e-06
    %v48 = vadd.f32 %v46, 1e-06
    %v49 = vmul.f32 %v47, %v47
    %v50 = vmul.f32 %v48, %v48
    %51 = vadd.xlane.f32.xlu0 %v49
    %v52 = vpop.xlane.xlu0 %51
    %53 = vadd.xlane.f32.xlu0 %v50
    %v54 = vpop.xlane.xlu0 %53
    %v55 = vrsqrt.pop %v52
    %v56 = vmul.f32 %v55, %v52
    %v57 = vmul.f32 %v56, %v55
    %v58 = vmul.f32 0.5, %v57
    %v59 = vsub.f32 1.5, %v58
    %v60 = vmul.f32 %v55, %v59
    %v61 = vmul.f32 %v52, %v60
    %vm62 = vcmp.eq.f32.partialorder %v52, inf
    %v63 = vsel %vm62, %v52, %v61
    %vm64 = vcmp.eq.f32.partialorder %v52, 0.0
    %v65 = vand.u32 %v52, 2147483648
    %v66 = vsel %vm64, %v65, %v63
    %v67 = vrsqrt.pop %v54
    %v68 = vmul.f32 %v67, %v54
    %v69 = vmul.f32 %v68, %v67
    %v70 = vmul.f32 0.5, %v69
    %v71 = vsub.f32 1.5, %v70
    %v72 = vmul.f32 %v67, %v71
    %v73 = vmul.f32 %v54, %v72
    %vm74 = vcmp.eq.f32.partialorder %v54, inf
    %v75 = vsel %vm74, %v54, %v73
    %vm76 = vcmp.eq.f32.partialorder %v54, 0.0
    %v77 = vand.u32 %v54, 2147483648
    %v78 = vsel %vm76, %v77, %v75
    %v79 = vsub.f32 %v33, %v43
    %v80 = vsub.f32 %v34, %v44
    %v81 = vadd.f32 %v79, 1e-06
    %v82 = vadd.f32 %v80, 1e-06
    %v83 = vmul.f32 %v81, %v81
    %v84 = vmul.f32 %v82, %v82
    %85 = vadd.xlane.f32.xlu0 %v83
    %v86 = vpop.xlane.xlu0 %85
    %87 = vadd.xlane.f32.xlu0 %v84
    %v88 = vpop.xlane.xlu0 %87
    %v89 = vrsqrt.pop %v86
    %v90 = vmul.f32 %v89, %v86
    %v91 = vmul.f32 %v90, %v89
    %v92 = vmul.f32 0.5, %v91
    %v93 = vsub.f32 1.5, %v92
    %v94 = vmul.f32 %v89, %v93
    %v95 = vmul.f32 %v86, %v94
    %vm96 = vcmp.eq.f32.partialorder %v86, inf
    %v97 = vsel %vm96, %v86, %v95
    %vm98 = vcmp.eq.f32.partialorder %v86, 0.0
    %v99 = vand.u32 %v86, 2147483648
    %v100 = vsel %vm98, %v99, %v97
    %v101 = vrsqrt.pop %v88
    %v102 = vmul.f32 %v101, %v88
    %v103 = vmul.f32 %v102, %v101
    %v104 = vmul.f32 0.5, %v103
    %v105 = vsub.f32 1.5, %v104
    %v106 = vmul.f32 %v101, %v105
    %v107 = vmul.f32 %v88, %v106
    %vm108 = vcmp.eq.f32.partialorder %v88, inf
    %v109 = vsel %vm108, %v88, %v107
    %vm110 = vcmp.eq.f32.partialorder %v88, 0.0
    %v111 = vand.u32 %v88, 2147483648
    %v112 = vsel %vm110, %v111, %v109
    %v113 = vsub.f32 %v66, %v100
    %v114 = vsub.f32 %v78, %v112
    %v115 = vadd.f32 %v113, 1.0
    %v116 = vadd.f32 %v114, 1.0
    %v117 = vmax.f32 %v115, 0.0
    %v118 = vmax.f32 %v116, 0.0
    %s119 = smul.u32 0, 16
    %v120 = vlaneseq
    %v121 = vshrl.u32 %v120, 7
    %v122 = vadd.s32 %v121, 8
    %v123 = vstv %s119
    %v124 = vadd.s32 %v123, %v121
    %v125 = vadd.s32 %v123, %v122
    %vm126 = vcmp.lt.s32.totalorder %v124, 16
    %vm127 = vcmp.lt.s32.totalorder %v125, 16
    %v128 = vsel %vm126, %v117, 0.0
    %v129 = vsel %vm127, %v118, 0.0
    %v130 = vld [vmem:[#allocation2] sm:$0x1]
    %vm131 = vcmask 7168
    %v132 = vsel %vm131, %v128, 0.0
    %v133 = vsel %vm131, %v129, 0.0
    %v134 = vadd.f32 %v132, %v133
    %135 = vadd.xlane.f32.xlu0 %v134
    %v136 = vpop.xlane.xlu0 %135
    %v137 = vrot.slane %v136, 4
    %v138 = vadd.f32 %v136, %v137
    %v139 = vrot.slane %v138, 2
    %v140 = vadd.f32 %v138, %v139
    %v141 = vrot.slane %v140, 1
    %v142 = vadd.f32 %v140, %v141
    %s143 = vtos %v142
    %v144 = vstv %s143
    %v145 = vadd.f32 %v130, %v144
    %vm146 = vcmask 0
    %147 = vst.msk [vmem:[#allocation2] sm:$0x1] %vm146, %v145
    // Predicated region
    $region14: #{tpu_custom_call.1} parent=1 // pred_check
      %p148 = pneg %p25
    $region15: #{tpu_custom_call.1} parent=1 // pred_check_branch
      %150 = sbr.rel (%p148) target = $region17
    $region16: #{tpu_custom_call.1} parent=1 // pred_region
      %v151 = vld [vmem:[#allocation2] sm:$0x1]
      %152 = vst.msk [vmem:[#allocation6] sm:$0x1] %vm146, %v151
    $region17: #{tpu_custom_call.1} parent=1 // pred_fallthru
      _
    // Predicated region
    $region18: #{tpu_custom_call.1} parent=1 // pred_check
      _
    $region19: #{tpu_custom_call.1} parent=1 // pred_check_branch
      %154 = sbr.rel (0) target = $region21
    $region20: #{tpu_custom_call.1} parent=1 // pred_region
      %156 = vsyncadd [#allocation5], 0
      %s158 = sshll.u32 [#allocation6], 4
      %s159 = int_to_ptr.vmem [resolvable:$true] %s158
      %s160 = sshll.u32 %s1, 4
      %s161 = int_to_ptr.hbm [resolvable:$true] %s160
      %163 = dma.vmem_to_hbm [thread:$0]  %s159, 16, %s161, [#allocation5]
    $region21: #{tpu_custom_call.1} parent=1 // pred_fallthru
      _
    // Predicated region
    $region22: #{tpu_custom_call.1} parent=1 // pred_check
      _
    $region23: #{tpu_custom_call.1} parent=1 // pred_check_branch
      %165 = sbr.rel (0) target = $region25
    $region24: #{tpu_custom_call.1} parent=1 // pred_region
      %167 = dma.done [#allocation5], 16
    $region25: #{tpu_custom_call.1} parent=1 // pred_fallthru
      _
    %168 = vsyncpa [#allocation4], 1
    %169 = vsyncpa [#allocation5], 1

</llo_original>
